<compile_context>
chip_gen: v7x
topology: tpu7x:2x2x1
jax: 0.10.0
libtpu: 0.0.40
codegen_flags: <defaults>
</compile_context>

<pallas_src>
import math

import jax
import jax.numpy as jnp
from jax.experimental import pallas as pl
from jax.experimental.pallas import tpu as pltpu


def _round_up(x, m):
    return ((x + m - 1) // m) * m


def _mlp_block_kernel(x_ref, w1_ref, b1_ref, mask_ref, w2_ref, b2_ref, o_ref):
    # y = [att_hidden | skip] for `fold` row-groups packed along lanes.
    y = jnp.dot(x_ref[...], w1_ref[...],
                preferred_element_type=jnp.float32) + b1_ref[...]
    # ReLU only on the att-hidden lanes (mask==1); skip lanes pass through.
    h = jnp.where(mask_ref[...] != 0.0, jnp.maximum(y, 0.0), y)
    # Second matmul with [gate*W2 ; I] folded in -> att*gate + skip in one dot.
    o = jnp.dot(h.astype(w2_ref.dtype), w2_ref[...],
                preferred_element_type=jnp.float32) + b2_ref[...]
    o_ref[...] = o.astype(o_ref.dtype)


def _pick_fold(in_feat, out_feat, cbytes, max_fold=8, max_weight_bytes=4 << 20):
    """Smallest row-fold that makes the streams lane-dense, if cheap enough."""
    f_out = 128 // math.gcd(out_feat, 128)
    f_in = 128 // math.gcd(in_feat, 128)
    f_lcm = f_out * f_in // math.gcd(f_out, f_in)
    for f in (f_lcm, f_out, 1):
        wbytes = f * f * (in_feat * 2 * out_feat + 2 * out_feat * out_feat) * cbytes
        if f <= max_fold and wbytes <= max_weight_bytes:
            return f
    return 1


def mlp_block(x, w1, b1, w2, b2, wp, bp, gate=1.0, *,
              tile_m=None, compute_dtype=None, out_dtype=None):
    """x: [B, N, in_feat] -> [B, N, out_feat] (out_dtype, default x.dtype)."""
    B, N, in_feat = x.shape
    out_feat = w1.shape[1]
    M = B * N

    cdt = jnp.dtype(compute_dtype) if compute_dtype is not None else jnp.dtype(x.dtype)
    odt = jnp.dtype(out_dtype) if out_dtype is not None else jnp.dtype(x.dtype)
    cbytes = cdt.itemsize
    obytes = odt.itemsize

    # gate is static for rezero_skip=False; folded into W2/b2 at trace time.
    gate = float(gate)

    # ---- parameter folding (wrapper-side, once per trace) ----
    w1p = jnp.concatenate([w1, wp], axis=1)                       # (in, 2*out)
    b1p = jnp.concatenate([b1, bp]).reshape(1, 2 * out_feat)
    w2s = jnp.concatenate([w2 * gate, jnp.eye(out_feat, dtype=jnp.float32)],
                          axis=0)                                 # (2*out, out)
    b2s = (b2 * gate).reshape(1, out_feat)

    # ---- lane folding: pack `fold` rows into one lane-dense row ----
    fold = _pick_fold(in_feat, out_feat, cbytes)
    idf = jnp.eye(fold, dtype=jnp.float32)
    w1f = jnp.kron(idf, w1p).astype(cdt)        # (fold*in, fold*2*out) blk-diag
    w2f = jnp.kron(idf, w2s).astype(cdt)        # (fold*2*out, fold*out)
    b1f = jnp.tile(b1p, (1, fold)).astype(jnp.float32)
    b2f = jnp.tile(b2s, (1, fold)).astype(jnp.float32)
    relu_mask = jnp.tile(
        jnp.concatenate([jnp.ones((1, out_feat), jnp.float32),
                         jnp.zeros((1, out_feat), jnp.float32)], axis=1),
        (1, fold))

    wx = fold * in_feat          # folded X width
    wy = fold * 2 * out_feat     # folded intermediate width
    wo = fold * out_feat         # folded output width

    # ---- VMEM footprint estimate (lanes pad to 128, sublanes to 8) ----
    lx, ly, lo = _round_up(wx, 128), _round_up(wy, 128), _round_up(wo, 128)
    w_bytes = 2 * (_round_up(wx, 8) * ly * cbytes        # W1f (2x pipeline bufs)
                   + _round_up(wy, 8) * lo * cbytes      # W2f
                   + 8 * (2 * ly + lo) * 4)              # b1f, mask, b2f
    per_row = 2 * (lx * cbytes + lo * obytes)            # dbl-buffered x / out
    inter_row = ly * (4 + cbytes)                        # y (f32) + h (cdt)
    step_row = lx * cbytes + lo * obytes                 # HBM bytes / folded row

    try:
        vmem_cap = int(pltpu.get_tpu_info().vmem_capacity_bytes)
    except Exception:
        vmem_cap = 64 << 20                              # safe on all gens
    tile_budget = max(vmem_cap // 2 - w_bytes, 0)

    # ---- folded-row tile selection ----
    align = 16                                           # sublane-safe for f32/bf16
    MF = -(-M // fold)
    if tile_m is not None:
        tile_rows = _round_up(max(int(tile_m) // fold, 1), align)
    else:
        # target ~4 MiB of X+out traffic per grid step
        tile_rows = _round_up(max((4 << 20) // max(step_row, 1), align), align)
    tile_rows = min(tile_rows, _round_up(MF, align))
    if MF > align:                                       # >=2 steps (v7x megacore)
        tile_rows = min(tile_rows, max(align, _round_up(-(-MF // 2), align)))
    while tile_rows > align and tile_rows * (per_row + inter_row) > tile_budget:
        tile_rows = _round_up(tile_rows // 2, align)
    tile_rows = max(tile_rows, align)

    MFp = _round_up(MF, tile_rows)
    Mp = MFp * fold
    grid = (MFp // tile_rows,)

    # NOTE: if weights alone exceed ~90% of VMEM nothing fits; this kernel
    # assumes per-layer weights are VMEM-resident (true for this module).
    need = w_bytes + tile_rows * (per_row + inter_row) + (2 << 20)
    vmem_limit = int(min(max(need, 16 << 20), int(vmem_cap * 0.9)))

    x2d = x.reshape(M, in_feat).astype(cdt)
    if Mp > M:
        x2d = jnp.pad(x2d, ((0, Mp - M), (0, 0)))
    xf = x2d.reshape(MFp, wx)                            # free row-major reshape

    outf = pl.pallas_call(
        _mlp_block_kernel,
        out_shape=jax.ShapeDtypeStruct((MFp, wo), odt),
        grid_spec=pltpu.PrefetchScalarGridSpec(
            num_scalar_prefetch=0,
            grid=grid,
            in_specs=[
                pl.BlockSpec((tile_rows, wx), lambda i: (i, 0)),   # X (folded)
                pl.BlockSpec((wx, wy), lambda i: (0, 0)),          # blkdiag [W1|Wp]
                pl.BlockSpec((1, wy), lambda i: (0, 0)),           # [b1|bp] tiled
                pl.BlockSpec((1, wy), lambda i: (0, 0)),           # ReLU lane mask
                pl.BlockSpec((wy, wo), lambda i: (0, 0)),          # blkdiag [g*W2;I]
                pl.BlockSpec((1, wo), lambda i: (0, 0)),           # g*b2 tiled
            ],
            out_specs=pl.BlockSpec((tile_rows, wo), lambda i: (i, 0)),
        ),
        compiler_params=pltpu.CompilerParams(
            dimension_semantics=("parallel",),
            vmem_limit_bytes=vmem_limit,
        ),
    )(xf, w1f, b1f, relu_mask, w2f, b2f)

    # Row-major bitcast back to per-row layout, crop pad rows.
    return outf.reshape(Mp, out_feat)[:M].reshape(B, N, out_feat)


def reference(x, w1, b1, w2, b2, wp, bp, gate):
    h = jnp.maximum(x @ w1 + b1, 0.0)
    att = h @ w2 + b2
    skip = x @ wp + bp
    return att * gate + skip


if __name__ == "__main__":
    # Small shapes consistent with the module's forward (node features).
    B, N, in_feat, out_feat = 2, 64, 32, 64

    key = jax.random.PRNGKey(0)
    kx, k1, kb1, k2, kb2, kp, kbp = jax.random.split(key, 7)

    x = jax.random.normal(kx, (B, N, in_feat), jnp.float32)

    # Deterministic synthetic parameter init (PyTorch-Linear-like scaling).
    w1 = jax.random.uniform(k1, (in_feat, out_feat), jnp.float32,
                            -1.0, 1.0) / jnp.sqrt(in_feat)
    b1 = jax.random.uniform(kb1, (out_feat,), jnp.float32,
                            -1.0, 1.0) / jnp.sqrt(in_feat)
    w2 = jax.random.uniform(k2, (out_feat, out_feat), jnp.float32,
                            -1.0, 1.0) / jnp.sqrt(out_feat)
    b2 = jax.random.uniform(kb2, (out_feat,), jnp.float32,
                            -1.0, 1.0) / jnp.sqrt(out_feat)
    wp = jax.random.uniform(kp, (in_feat, out_feat), jnp.float32,
                            -1.0, 1.0) / jnp.sqrt(in_feat)
    bp = jax.random.uniform(kbp, (out_feat,), jnp.float32,
                            -1.0, 1.0) / jnp.sqrt(in_feat)

    gate = 1.0  # rezero_skip=False -> constant 1.0 gate (folded at trace time)

    ref = reference(x, w1, b1, w2, b2, wp, bp, gate)

    # f32 path: matches reference tightly (skip goes through an exact identity
    # matmul; block-diagonal zero blocks contribute exact zeros).
    out_f32 = mlp_block(x, w1, b1, w2, b2, wp, bp, gate)
    out_f32 = jax.block_until_ready(out_f32)
    assert out_f32.shape == (B, N, out_feat)
    assert jnp.allclose(out_f32, ref, atol=2e-5, rtol=2e-5), \
        f"f32 max abs err = {jnp.max(jnp.abs(out_f32 - ref))}"

    # bf16 compute + bf16 output: halves both HBM streams (biggest win on v5e).
    out_bf16 = mlp_block(x, w1, b1, w2, b2, wp, bp, gate,
                         compute_dtype=jnp.bfloat16, out_dtype=jnp.bfloat16)
    out_bf16 = jax.block_until_ready(out_bf16)
    assert out_bf16.shape == (B, N, out_feat)
    assert out_bf16.dtype == jnp.bfloat16
    assert jnp.allclose(out_bf16.astype(jnp.float32), ref,
                        atol=5e-2, rtol=5e-2), \
        f"bf16 max abs err = {jnp.max(jnp.abs(out_bf16.astype(jnp.float32) - ref))}"

    print("KERNEL_OK")
</pallas_src>

<mosaic_0001>
module attributes {stable_mosaic.version = 11 : i64} {
  func.func @_mlp_block_kernel(%arg0: i32, %arg1: memref<16x128xf32, #tpu.memory_space<vmem>>, %arg2: memref<128x512xf32, #tpu.memory_space<vmem>>, %arg3: memref<1x512xf32, #tpu.memory_space<vmem>>, %arg4: memref<1x512xf32, #tpu.memory_space<vmem>>, %arg5: memref<512x256xf32, #tpu.memory_space<vmem>>, %arg6: memref<1x256xf32, #tpu.memory_space<vmem>>, %arg7: memref<16x256xf32, #tpu.memory_space<vmem>>) attributes {dimension_semantics = [#tpu.dimension_semantics<parallel>], iteration_bounds = array<i64: 2>, scalar_prefetch = 0 : i64, scratch_operands = 0 : i64, tpu.core_type = #tpu.core_type<tc>, window_params = [{transform_indices = @transform_0, window_bounds = array<i64: 16, 128>}, {pipeline_mode = #tpu.pipeline_mode<synchronous>, transform_indices = @transform_1, window_bounds = array<i64: 128, 512>}, {pipeline_mode = #tpu.pipeline_mode<synchronous>, transform_indices = @transform_2, window_bounds = array<i64: 1, 512>}, {pipeline_mode = #tpu.pipeline_mode<synchronous>, transform_indices = @transform_3, window_bounds = array<i64: 1, 512>}, {pipeline_mode = #tpu.pipeline_mode<synchronous>, transform_indices = @transform_4, window_bounds = array<i64: 512, 256>}, {pipeline_mode = #tpu.pipeline_mode<synchronous>, transform_indices = @transform_5, window_bounds = array<i64: 1, 256>}, {transform_indices = @transform_6, window_bounds = array<i64: 16, 256>}]} {
    %c0 = arith.constant 0 : index
    %c0_0 = arith.constant 0 : index
    %0 = vector.load %arg1[%c0, %c0_0] : memref<16x128xf32, #tpu.memory_space<vmem>>, vector<16x128xf32>
    %c0_1 = arith.constant 0 : index
    %c0_2 = arith.constant 0 : index
    %1 = vector.load %arg2[%c0_1, %c0_2] : memref<128x512xf32, #tpu.memory_space<vmem>>, vector<128x512xf32>
    %cst = arith.constant dense<0.000000e+00> : vector<16x512xf32>
    %2 = tpu.matmul %0, %1, %cst {dimension_numbers = #tpu.dot_dimension_numbers<[1], [0], [0], [1], [0, 0, 1, 1], [], []>} : vector<16x128xf32>, vector<128x512xf32>, vector<16x512xf32> -> vector<16x512xf32>
    %c0_3 = arith.constant 0 : index
    %c0_4 = arith.constant 0 : index
    %3 = vector.load %arg3[%c0_3, %c0_4] : memref<1x512xf32, #tpu.memory_space<vmem>>, vector<1x512xf32>
    %4 = vector.broadcast %3 : vector<1x512xf32> to vector<16x512xf32>
    %5 = arith.addf %2, %4 : vector<16x512xf32>
    %c0_5 = arith.constant 0 : index
    %c0_6 = arith.constant 0 : index
    %6 = vector.load %arg4[%c0_5, %c0_6] : memref<1x512xf32, #tpu.memory_space<vmem>>, vector<1x512xf32>
    %cst_7 = arith.constant 0.000000e+00 : f32
    %7 = vector.broadcast %cst_7 : f32 to vector<1x512xf32>
    %8 = arith.cmpf one, %6, %7 : vector<1x512xf32>
    %cst_8 = arith.constant 0.000000e+00 : f32
    %9 = vector.broadcast %cst_8 : f32 to vector<16x512xf32>
    %10 = arith.maximumf %5, %9 : vector<16x512xf32>
    %11 = vector.shape_cast %8 : vector<1x512xi1> to vector<1x512xi1>
    %12 = vector.broadcast %11 : vector<1x512xi1> to vector<16x512xi1>
    %13 = arith.select %12, %10, %5 : vector<16x512xi1>, vector<16x512xf32>
    %c0_9 = arith.constant 0 : index
    %c0_10 = arith.constant 0 : index
    %14 = vector.load %arg5[%c0_9, %c0_10] : memref<512x256xf32, #tpu.memory_space<vmem>>, vector<512x256xf32>
    %cst_11 = arith.constant dense<0.000000e+00> : vector<16x256xf32>
    %15 = tpu.matmul %13, %14, %cst_11 {dimension_numbers = #tpu.dot_dimension_numbers<[1], [0], [0], [1], [0, 0, 1, 1], [], []>} : vector<16x512xf32>, vector<512x256xf32>, vector<16x256xf32> -> vector<16x256xf32>
    %c0_12 = arith.constant 0 : index
    %c0_13 = arith.constant 0 : index
    %16 = vector.load %arg6[%c0_12, %c0_13] : memref<1x256xf32, #tpu.memory_space<vmem>>, vector<1x256xf32>
    %17 = vector.broadcast %16 : vector<1x256xf32> to vector<16x256xf32>
    %18 = arith.addf %15, %17 : vector<16x256xf32>
    %c0_14 = arith.constant 0 : index
    %c0_15 = arith.constant 0 : index
    %19 = vector.load %arg7[%c0_14, %c0_15] : memref<16x256xf32, #tpu.memory_space<vmem>>, vector<16x256xf32>
    tpu.vector_store %arg7[%c0_14, %c0_15], %18 {strides = array<i32>} : memref<16x256xf32, #tpu.memory_space<vmem>>, vector<16x256xf32>,
    return
  }
  func.func @transform_0(%arg0: i32) -> (i32, i32) {
    %c0_i32 = arith.constant 0 : i32
    %c0_i32_0 = arith.constant 0 : i32
    return %arg0, %c0_i32 : i32, i32
  }
  func.func @transform_1(%arg0: i32) -> (i32, i32) {
    %c0_i32 = arith.constant 0 : i32
    %c0_i32_0 = arith.constant 0 : i32
    %c0_i32_1 = arith.constant 0 : i32
    return %c0_i32, %c0_i32_0 : i32, i32
  }
  func.func @transform_2(%arg0: i32) -> (i32, i32) {
    %c0_i32 = arith.constant 0 : i32
    %c0_i32_0 = arith.constant 0 : i32
    %c0_i32_1 = arith.constant 0 : i32
    return %c0_i32, %c0_i32_0 : i32, i32
  }
  func.func @transform_3(%arg0: i32) -> (i32, i32) {
    %c0_i32 = arith.constant 0 : i32
    %c0_i32_0 = arith.constant 0 : i32
    %c0_i32_1 = arith.constant 0 : i32
    return %c0_i32, %c0_i32_0 : i32, i32
  }
  func.func @transform_4(%arg0: i32) -> (i32, i32) {
    %c0_i32 = arith.constant 0 : i32
    %c0_i32_0 = arith.constant 0 : i32
    %c0_i32_1 = arith.constant 0 : i32
    return %c0_i32, %c0_i32_0 : i32, i32
  }
  func.func @transform_5(%arg0: i32) -> (i32, i32) {
    %c0_i32 = arith.constant 0 : i32
    %c0_i32_0 = arith.constant 0 : i32
    %c0_i32_1 = arith.constant 0 : i32
    return %c0_i32, %c0_i32_0 : i32, i32
  }
  func.func @transform_6(%arg0: i32) -> (i32, i32) {
    %c0_i32 = arith.constant 0 : i32
    %c0_i32_0 = arith.constant 0 : i32
    return %arg0, %c0_i32 : i32, i32
  }
}

</mosaic_0001>

<llo_original>
// kernel: tpu_custom_call.1
$region0: #{tpu_custom_call.1}
  #allocation0 [shape = 'u32[]', space=smem, size = 0x4, offset = 0x4, fixed_abs, tag = 'smem constant byte address 0x4 - core index']
  #allocation1 [shape = 'u32[144,128]{1,0:T(1,128)}', space=vmem, size = 0x12000, scoped, tag = 'internal scratch']
  %s0 = inlined_call_operand.hbm [shape: f32[32,128], index: 0, kind: input, shape index: {}]
  %s1 = inlined_call_operand.hbm [shape: f32[128,512], index: 1, kind: input, shape index: {}]
  %s2 = inlined_call_operand.vmem [shape: f32[1,512], index: 2, kind: input, shape index: {}]
  %s3 = inlined_call_operand.vmem [shape: f32[1,512], index: 3, kind: input, shape index: {}]
  %s4 = inlined_call_operand.hbm [shape: f32[512,256], index: 4, kind: input, shape index: {}]
  %s5 = inlined_call_operand.vmem [shape: f32[1,256], index: 5, kind: input, shape index: {}]
  %s6 = inlined_call_operand.hbm [shape: f32[32,256], index: 6, kind: output, shape index: {}]
  %s7 = sld [smem:[#allocation0]]
  $region69: #{tpu_custom_call.1} parent=0
    _
  %s9 = ssub.s32 1, %s7
  %s10 = scalar_select 0, %s9, %s7
  $region1: #{tpu_custom_call.1} parent=0
    #allocation2 [shape = 'u8[16384]{0}', space=vmem, size = 0x4000, scoped, tag = 'input window, operand 0']
    #allocation3 [shape = 's32[2]{0}', space=sflag, size = 0x8, scoped, tag = 'scoped memory for tpu_custom_call.1']
    #allocation4 [shape = 's32[2]{0}', space=sflag, size = 0x8, scoped, tag = 'scoped memory for tpu_custom_call.1']
    #allocation5 [shape = 'u8[262144]{0}', space=vmem, size = 0x40000, scoped, tag = 'input window, operand 1, single buffered']
    #allocation6 [shape = 's32[1]{0}', space=sflag, size = 0x4, scoped, tag = 'scoped memory for tpu_custom_call.1']
    #allocation7 [shape = 'u8[524288]{0}', space=vmem, size = 0x80000, scoped, tag = 'input window, operand 4, single buffered']
    #allocation8 [shape = 'u8[32768]{0}', space=vmem, size = 0x8000, scoped, tag = 'output window, operand 0']
    %11 = vsyncpa [#allocation3], 0
    %s12 = scalar_lea.sflag [#allocation3], 1
    %13 = vsyncpa %s12, 0
    %14 = vsyncpa [#allocation6], 0
    %15 = vsyncpa [#allocation4], 0
    %s16 = scalar_lea.sflag [#allocation4], 1
    %17 = vsyncpa %s16, 0
    loop: start=0, step=1, limit=4
    $region2: #{tpu_custom_call.1} parent=1 // loop_pre_header
      _
    $region3: #{tpu_custom_call.1} parent=1 // loop_header
      %s19 = sphi 0, %s23
      %p20 = scmp.ge.s32.totalorder %s19, 4
      %s29 = sphi 0, %s31
      %s32 = sphi 0, %s29
      %s33 = sphi 0, %s32
      %s49 = sphi 0, %s33
      %s53 = sphi 0, %s53
      %s55 = sphi 0, %s53
      %s56 = sphi 0, %s55
      %s70 = sphi 0, %s56
      %s74 = sphi 0, %s74
      %s76 = sphi 0, %s74
      %s77 = sphi 0, %s76
      %s91 = sphi 0, %s77
      %s95 = sphi 0, %s95
      %s97 = sphi 0, %s95
      %s98 = sphi 0, %s97
      %s112 = sphi 0, %s98
      %s116 = sphi 0, %s116
      %s118 = sphi 0, %s116
      %s119 = sphi 0, %s118
      %s133 = sphi 0, %s119
      %s137 = sphi 0, %s137
      %s139 = sphi 0, %s137
      %s140 = sphi 0, %s139
      %s154 = sphi 0, %s140
      %s160 = sphi 0, %s162
      %s163 = sphi 0, %s160
      %s164 = sphi 0, %s163
      %s180 = sphi 0, %s164
    $region4: #{tpu_custom_call.1} parent=1 // loop_header_branch
      %22 = sbr.rel (%p20) target = $region8
    $region5: #{tpu_custom_call.1} parent=1 // loop_body
      %s24 = ssub.s32 %s19, 1
      %s25 = ssub.s32 %s19, 2
      %s26 = sadd.s32 %s19, 1
      %s27 = ssub.s32 %s19, %s26
      %p28 = scmp.eq.s32.totalorder %s27, 0
      %s30 = sadd.s32 %s29, 1
      %s31 = scalar_select %p28, %s29, %s30
      %p34 = pneg %p28
      %p35 = scmp.eq.s32.totalorder %s19, 1
      %p36 = por %p34, %p35
      %p37 = scmp.ne.s32.totalorder %s29, %s32
      %p38 = scmp.eq.s32.totalorder %s19, 0
      %p39 = por %p37, %p38
      %p40 = scmp.ne.s32.totalorder %s29, %s32
      %p41 = scmp.eq.s32.totalorder %s24, 1
      %p42 = por %p40, %p41
      %p43 = scmp.ne.s32.totalorder %s32, %s33
      %p44 = scmp.eq.s32.totalorder %s24, 0
      %p45 = por %p43, %p44
      %p46 = scmp.ne.s32.totalorder %s32, %s33
      %p47 = scmp.eq.s32.totalorder %s25, 1
      %p48 = por %p46, %p47
      %p50 = scmp.ne.s32.totalorder %s33, %s49
      %p51 = scmp.eq.s32.totalorder %s25, 0
      %p52 = por %p50, %p51
      %s54 = sadd.s32 %s53, 1
      %p57 = scmp.eq.s32.totalorder %s19, 1
      %p58 = scmp.ne.s32.totalorder %s53, %s55
      %p59 = scmp.eq.s32.totalorder %s19, 0
      %p60 = por %p58, %p59
      %p61 = scmp.ne.s32.totalorder %s53, %s55
      %p62 = scmp.eq.s32.totalorder %s24, 1
      %p63 = por %p61, %p62
      %p64 = scmp.ne.s32.totalorder %s55, %s56
      %p65 = scmp.eq.s32.totalorder %s24, 0
      %p66 = por %p64, %p65
      %p67 = scmp.ne.s32.totalorder %s55, %s56
      %p68 = scmp.eq.s32.totalorder %s25, 1
      %p69 = por %p67, %p68
      %p71 = scmp.ne.s32.totalorder %s56, %s70
      %p72 = scmp.eq.s32.totalorder %s25, 0
      %p73 = por %p71, %p72
      %s75 = sadd.s32 %s74, 1
      %p78 = scmp.eq.s32.totalorder %s19, 1
      %p79 = scmp.ne.s32.totalorder %s74, %s76
      %p80 = scmp.eq.s32.totalorder %s19, 0
      %p81 = por %p79, %p80
      %p82 = scmp.ne.s32.totalorder %s74, %s76
      %p83 = scmp.eq.s32.totalorder %s24, 1
      %p84 = por %p82, %p83
      %p85 = scmp.ne.s32.totalorder %s76, %s77
      %p86 = scmp.eq.s32.totalorder %s24, 0
      %p87 = por %p85, %p86
      %p88 = scmp.ne.s32.totalorder %s76, %s77
      %p89 = scmp.eq.s32.totalorder %s25, 1
      %p90 = por %p88, %p89
      %p92 = scmp.ne.s32.totalorder %s77, %s91
      %p93 = scmp.eq.s32.totalorder %s25, 0
      %p94 = por %p92, %p93
      %s96 = sadd.s32 %s95, 1
      %p99 = scmp.eq.s32.totalorder %s19, 1
      %p100 = scmp.ne.s32.totalorder %s95, %s97
      %p101 = scmp.eq.s32.totalorder %s19, 0
      %p102 = por %p100, %p101
      %p103 = scmp.ne.s32.totalorder %s95, %s97
      %p104 = scmp.eq.s32.totalorder %s24, 1
      %p105 = por %p103, %p104
      %p106 = scmp.ne.s32.totalorder %s97, %s98
      %p107 = scmp.eq.s32.totalorder %s24, 0
      %p108 = por %p106, %p107
      %p109 = scmp.ne.s32.totalorder %s97, %s98
      %p110 = scmp.eq.s32.totalorder %s25, 1
      %p111 = por %p109, %p110
      %p113 = scmp.ne.s32.totalorder %s98, %s112
      %p114 = scmp.eq.s32.totalorder %s25, 0
      %p115 = por %p113, %p114
      %s117 = sadd.s32 %s116, 1
      %p120 = scmp.eq.s32.totalorder %s19, 1
      %p121 = scmp.ne.s32.totalorder %s116, %s118
      %p122 = scmp.eq.s32.totalorder %s19, 0
      %p123 = por %p121, %p122
      %p124 = scmp.ne.s32.totalorder %s116, %s118
      %p125 = scmp.eq.s32.totalorder %s24, 1
      %p126 = por %p124, %p125
      %p127 = scmp.ne.s32.totalorder %s118, %s119
      %p128 = scmp.eq.s32.totalorder %s24, 0
      %p129 = por %p127, %p128
      %p130 = scmp.ne.s32.totalorder %s118, %s119
      %p131 = scmp.eq.s32.totalorder %s25, 1
      %p132 = por %p130, %p131
      %p134 = scmp.ne.s32.totalorder %s119, %s133
      %p135 = scmp.eq.s32.totalorder %s25, 0
      %p136 = por %p134, %p135
      %s138 = sadd.s32 %s137, 1
      %p141 = scmp.eq.s32.totalorder %s19, 1
      %p142 = scmp.ne.s32.totalorder %s137, %s139
      %p143 = scmp.eq.s32.totalorder %s19, 0
      %p144 = por %p142, %p143
      %p145 = scmp.ne.s32.totalorder %s137, %s139
      %p146 = scmp.eq.s32.totalorder %s24, 1
      %p147 = por %p145, %p146
      %p148 = scmp.ne.s32.totalorder %s139, %s140
      %p149 = scmp.eq.s32.totalorder %s24, 0
      %p150 = por %p148, %p149
      %p151 = scmp.ne.s32.totalorder %s139, %s140
      %p152 = scmp.eq.s32.totalorder %s25, 1
      %p153 = por %p151, %p152
      %p155 = scmp.ne.s32.totalorder %s140, %s154
      %p156 = scmp.eq.s32.totalorder %s25, 0
      %p157 = por %p155, %p156
      %s158 = ssub.s32 %s19, %s26
      %p159 = scmp.eq.s32.totalorder %s158, 0
      %s161 = sadd.s32 %s160, 1
      %s162 = scalar_select %p159, %s160, %s161
      %p165 = pneg %p159
      %p166 = scmp.eq.s32.totalorder %s19, 1
      %p167 = por %p165, %p166
      %p168 = scmp.ne.s32.totalorder %s160, %s163
      %p169 = scmp.eq.s32.totalorder %s19, 0
      %p170 = por %p168, %p169
      %p171 = scmp.ne.s32.totalorder %s160, %s163
      %p172 = scmp.eq.s32.totalorder %s24, 1
      %p173 = por %p171, %p172
      %p174 = scmp.ne.s32.totalorder %s163, %s164
      %p175 = scmp.eq.s32.totalorder %s24, 0
      %p176 = por %p174, %p175
      %p177 = scmp.ne.s32.totalorder %s163, %s164
      %p178 = scmp.eq.s32.totalorder %s25, 1
      %p179 = por %p177, %p178
      %p181 = scmp.ne.s32.totalorder %s164, %s180
      %p182 = scmp.eq.s32.totalorder %s25, 0
      %p183 = por %p181, %p182
      %p184 = scmp.le.s32.totalorder 1, %s19
      %p185 = scmp.lt.s32.totalorder %s19, 3
      %p186 = pnand %p184, %p185
      %p187 = pneg %p186
      // Predicated region
      $region9: #{tpu_custom_call.1} parent=5 // pred_check
        _
      $region10: #{tpu_custom_call.1} parent=5 // pred_check_branch
        %189 = sbr.rel (%p186) target = $region12
      $region11: #{tpu_custom_call.1} parent=5 // pred_region
        %s190 = ssub.s32 %s19, 1
        // Predicated region
        $region13: #{tpu_custom_call.1} parent=11 // pred_check
          %p191 = pneg %p66
        $region14: #{tpu_custom_call.1} parent=11 // pred_check_branch
          %193 = sbr.rel (%p191) target = $region16
        $region15: #{tpu_custom_call.1} parent=11 // pred_region
          %s195 = ssub.s32 8192, 8192
          %196 = vsyncadd [#allocation6], %s195
          %s197 = sshll.u32 [#allocation5], 4
          %s198 = int_to_ptr.vmem [resolvable:$true] %s197
          %203 = dma.hbm_to_vmem [thread:$0]  %s1, 8192, %s198, [#allocation6], 512, 512, 32
        $region16: #{tpu_custom_call.1} parent=11 // pred_fallthru
          _
        // Predicated region
        $region17: #{tpu_custom_call.1} parent=11 // pred_check
          %p204 = pneg %p87
        $region18: #{tpu_custom_call.1} parent=11 // pred_check_branch
          %206 = sbr.rel (%p204) target = $region20
        $region19: #{tpu_custom_call.1} parent=11 // pred_region
          _
        $region20: #{tpu_custom_call.1} parent=11 // pred_fallthru
          _
        // Predicated region
        $region21: #{tpu_custom_call.1} parent=11 // pred_check
          %p207 = pneg %p108
        $region22: #{tpu_custom_call.1} parent=11 // pred_check_branch
          %209 = sbr.rel (%p207) target = $region24
        $region23: #{tpu_custom_call.1} parent=11 // pred_region
          _
        $region24: #{tpu_custom_call.1} parent=11 // pred_fallthru
          _
        // Predicated region
        $region25: #{tpu_custom_call.1} parent=11 // pred_check
          %p210 = pneg %p129
        $region26: #{tpu_custom_call.1} parent=11 // pred_check_branch
          %212 = sbr.rel (%p210) target = $region28
        $region27: #{tpu_custom_call.1} parent=11 // pred_region
          %s214 = ssub.s32 16384, 16384
          %215 = vsyncadd [#allocation6], %s214
          %s216 = sshll.u32 [#allocation7], 4
          %s217 = int_to_ptr.vmem [resolvable:$true] %s216
          %222 = dma.hbm_to_vmem [thread:$0]  %s4, 16384, %s217, [#allocation6], 256, 256, 16
        $region28: #{tpu_custom_call.1} parent=11 // pred_fallthru
          _
        // Predicated region
        $region29: #{tpu_custom_call.1} parent=11 // pred_check
          %p223 = pneg %p150
        $region30: #{tpu_custom_call.1} parent=11 // pred_check_branch
          %225 = sbr.rel (%p223) target = $region32
        $region31: #{tpu_custom_call.1} parent=11 // pred_region
          _
        $region32: #{tpu_custom_call.1} parent=11 // pred_fallthru
          _
      $region12: #{tpu_custom_call.1} parent=5 // pred_fallthru
        _
      %p226 = scmp.lt.s32.totalorder %s19, 2
      // Predicated region
      $region33: #{tpu_custom_call.1} parent=5 // pred_check
        %p227 = pneg %p226
      $region34: #{tpu_custom_call.1} parent=5 // pred_check_branch
        %229 = sbr.rel (%p227) target = $region36
      $region35: #{tpu_custom_call.1} parent=5 // pred_region
        // Predicated region
        $region37: #{tpu_custom_call.1} parent=35 // pred_check
          %p230 = pneg %p39
        $region38: #{tpu_custom_call.1} parent=35 // pred_check_branch
          %232 = sbr.rel (%p230) target = $region40
        $region39: #{tpu_custom_call.1} parent=35 // pred_region
          %s233 = sand.u32 %s29, 1
          %s234 = scalar_lea.sflag [#allocation3], %s233
          %s235 = sand.u32 %s29, 1
          %s236 = smul.addr %s235, 16
          %s237 = scalar_lea.vmem [#allocation2], %s236
          %s238 = smul.u32 2, %s19
          %s240 = ssub.s32 256, 256
          %241 = vsyncadd %s234, %s240
          %s242 = smul.addr %s238, 128
          %s243 = scalar_lea.hbm %s0, %s242
          %s244 = sshll.u32 %s237, 4
          %s245 = int_to_ptr.vmem [resolvable:$true] %s244
          %250 = dma.hbm_to_vmem [thread:$0]  %s243, 256, %s245, %s234, 128, 128, 8
        $region40: #{tpu_custom_call.1} parent=35 // pred_fallthru
          _
      $region36: #{tpu_custom_call.1} parent=5 // pred_fallthru
        _
      %p251 = scmp.le.s32.totalorder 1, %s19
      %p252 = scmp.lt.s32.totalorder %s19, 3
      %p253 = pnand %p251, %p252
      %p254 = pneg %p253
      // Predicated region
      $region41: #{tpu_custom_call.1} parent=5 // pred_check
        _
      $region42: #{tpu_custom_call.1} parent=5 // pred_check_branch
        %256 = sbr.rel (%p253) target = $region44
      $region43: #{tpu_custom_call.1} parent=5 // pred_region
        %s257 = ssub.s32 %s19, 1
        %s258 = sand.u32 %s32, 1
        %s259 = scalar_lea.sflag [#allocation3], %s258
        %s260 = sand.u32 %s32, 1
        %s261 = smul.addr %s260, 16
        %s262 = scalar_lea.vmem [#allocation2], %s261
        // Predicated region
        $region45: #{tpu_custom_call.1} parent=43 // pred_check
          %p263 = pneg %p45
        $region46: #{tpu_custom_call.1} parent=43 // pred_check_branch
          %265 = sbr.rel (%p263) target = $region48
        $region47: #{tpu_custom_call.1} parent=43 // pred_region
          %266 = dma.done %s259, 256
        $region48: #{tpu_custom_call.1} parent=43 // pred_fallthru
          _
        // Predicated region
        $region49: #{tpu_custom_call.1} parent=43 // pred_check
          %p267 = pneg %p66
        $region50: #{tpu_custom_call.1} parent=43 // pred_check_branch
          %269 = sbr.rel (%p267) target = $region52
        $region51: #{tpu_custom_call.1} parent=43 // pred_region
          %270 = dma.done [#allocation6], 8192
        $region52: #{tpu_custom_call.1} parent=43 // pred_fallthru
          _
        // Predicated region
        $region53: #{tpu_custom_call.1} parent=43 // pred_check
          %p271 = pneg %p129
        $region54: #{tpu_custom_call.1} parent=43 // pred_check_branch
          %273 = sbr.rel (%p271) target = $region56
        $region55: #{tpu_custom_call.1} parent=43 // pred_region
          %274 = dma.done [#allocation6], 16384
        $region56: #{tpu_custom_call.1} parent=43 // pred_fallthru
          _
        %s275 = sand.u32 %s32, 1
        %s276 = scalar_lea.sflag [#allocation3], %s275
        %s277 = sand.u32 %s32, 1
        %s278 = smul.addr %s277, 16
        %s279 = scalar_lea.vmem [#allocation2], %s278
        %p280 = pneg %p45
        %p281 = pneg %p42
        %p282 = pneg %p66
        %p283 = pneg %p63
        %p284 = pneg %p87
        %p285 = pneg %p84
        %p286 = pneg %p108
        %p287 = pneg %p105
        %p288 = pneg %p129
        %p289 = pneg %p126
        %p290 = pneg %p150
        %p291 = pneg %p147
        %p292 = pneg %p176
        %p293 = pneg %p173
        %s294 = sand.u32 %s163, 1
        %s295 = scalar_lea.sflag [#allocation4], %s294
        %s296 = sand.u32 %s163, 1
        %s297 = smul.addr %s296, 32
        %s298 = scalar_lea.vmem [#allocation8], %s297
        %s299 = smul.u32 2, %s24
        %s300 = smul.u32 2, %s24
        %v301 = vld [vmem:[%s262] sm:$0xff]
        %v302 = vld [vmem:[%s262 + $0x8] sm:$0xff]
        %v303 = vld [vmem:[#allocation5] sm:$0xff]
        %v304 = vld [vmem:[#allocation5 + $0x8] sm:$0xff]
        %v305 = vld [vmem:[#allocation5 + $0x10] sm:$0xff]
        %v306 = vld [vmem:[#allocation5 + $0x18] sm:$0xff]
        %v307 = vld [vmem:[#allocation5 + $0x20] sm:$0xff]
        %v308 = vld [vmem:[#allocation5 + $0x28] sm:$0xff]
        %v309 = vld [vmem:[#allocation5 + $0x30] sm:$0xff]
        %v310 = vld [vmem:[#allocation5 + $0x38] sm:$0xff]
        %v311 = vld [vmem:[#allocation5 + $0x40] sm:$0xff]
        %v312 = vld [vmem:[#allocation5 + $0x48] sm:$0xff]
        %v313 = vld [vmem:[#allocation5 + $0x50] sm:$0xff]
        %v314 = vld [vmem:[#allocation5 + $0x58] sm:$0xff]
        %v315 = vld [vmem:[#allocation5 + $0x60] sm:$0xff]
        %v316 = vld [vmem:[#allocation5 + $0x68] sm:$0xff]
        %v317 = vld [vmem:[#allocation5 + $0x70] sm:$0xff]
        %v318 = vld [vmem:[#allocation5 + $0x78] sm:$0xff]
        %v319 = vld [vmem:[#allocation5 + $0x80] sm:$0xff]
        %v320 = vld [vmem:[#allocation5 + $0x88] sm:$0xff]
        %v321 = vld [vmem:[#allocation5 + $0x90] sm:$0xff]
        %v322 = vld [vmem:[#allocation5 + $0x98] sm:$0xff]
        %v323 = vld [vmem:[#allocation5 + $0xa0] sm:$0xff]
        %v324 = vld [vmem:[#allocation5 + $0xa8] sm:$0xff]
        %v325 = vld [vmem:[#allocation5 + $0xb0] sm:$0xff]
        %v326 = vld [vmem:[#allocation5 + $0xb8] sm:$0xff]
        %v327 = vld [vmem:[#allocation5 + $0xc0] sm:$0xff]
        %v328 = vld [vmem:[#allocation5 + $0xc8] sm:$0xff]
        %v329 = vld [vmem:[#allocation5 + $0xd0] sm:$0xff]
        %v330 = vld [vmem:[#allocation5 + $0xd8] sm:$0xff]
        %v331 = vld [vmem:[#allocation5 + $0xe0] sm:$0xff]
        %v332 = vld [vmem:[#allocation5 + $0xe8] sm:$0xff]
        %v333 = vld [vmem:[#allocation5 + $0xf0] sm:$0xff]
        %v334 = vld [vmem:[#allocation5 + $0xf8] sm:$0xff]
        %v335 = vld [vmem:[#allocation5 + $0x100] sm:$0xff]
        %v336 = vld [vmem:[#allocation5 + $0x108] sm:$0xff]
        %v337 = vld [vmem:[#allocation5 + $0x110] sm:$0xff]
        %v338 = vld [vmem:[#allocation5 + $0x118] sm:$0xff]
        %v339 = vld [vmem:[#allocation5 + $0x120] sm:$0xff]
        %v340 = vld [vmem:[#allocation5 + $0x128] sm:$0xff]
        %v341 = vld [vmem:[#allocation5 + $0x130] sm:$0xff]
        %v342 = vld [vmem:[#allocation5 + $0x138] sm:$0xff]
        %v343 = vld [vmem:[#allocation5 + $0x140] sm:$0xff]
        %v344 = vld [vmem:[#allocation5 + $0x148] sm:$0xff]
        %v345 = vld [vmem:[#allocation5 + $0x150] sm:$0xff]
        %v346 = vld [vmem:[#allocation5 + $0x158] sm:$0xff]
        %v347 = vld [vmem:[#allocation5 + $0x160] sm:$0xff]
        %v348 = vld [vmem:[#allocation5 + $0x168] sm:$0xff]
        %v349 = vld [vmem:[#allocation5 + $0x170] sm:$0xff]
        %v350 = vld [vmem:[#allocation5 + $0x178] sm:$0xff]
        %v351 = vld [vmem:[#allocation5 + $0x180] sm:$0xff]
        %v352 = vld [vmem:[#allocation5 + $0x188] sm:$0xff]
        %v353 = vld [vmem:[#allocation5 + $0x190] sm:$0xff]
        %v354 = vld [vmem:[#allocation5 + $0x198] sm:$0xff]
        %v355 = vld [vmem:[#allocation5 + $0x1a0] sm:$0xff]
        %v356 = vld [vmem:[#allocation5 + $0x1a8] sm:$0xff]
        %v357 = vld [vmem:[#allocation5 + $0x1b0] sm:$0xff]
        %v358 = vld [vmem:[#allocation5 + $0x1b8] sm:$0xff]
        %v359 = vld [vmem:[#allocation5 + $0x1c0] sm:$0xff]
        %v360 = vld [vmem:[#allocation5 + $0x1c8] sm:$0xff]
        %v361 = vld [vmem:[#allocation5 + $0x1d0] sm:$0xff]
        %v362 = vld [vmem:[#allocation5 + $0x1d8] sm:$0xff]
        %v363 = vld [vmem:[#allocation5 + $0x1e0] sm:$0xff]
        %v364 = vld [vmem:[#allocation5 + $0x1e8] sm:$0xff]
        %v365 = vld [vmem:[#allocation5 + $0x1f0] sm:$0xff]
        %v366 = vld [vmem:[#allocation5 + $0x1f8] sm:$0xff]
        %v367 = vld [vmem:[%s2] sm:$0xf]
        %v369 = vlaneseq
        %v370 = vshrl.u32 %v369, 7
        %v371 = vsub.s32 0, %v370
        %v372 = vrot.slane %v367, %v371
        %v373 = vlaneseq
        %v374 = vshrl.u32 %v373, 7
        %v375 = vsub.s32 1, %v374
        %v376 = vrot.slane %v367, %v375
        %v377 = vlaneseq
        %v378 = vshrl.u32 %v377, 7
        %v379 = vsub.s32 2, %v378
        %v380 = vrot.slane %v367, %v379
        %v381 = vlaneseq
        %v382 = vshrl.u32 %v381, 7
        %v383 = vsub.s32 3, %v382
        %v384 = vrot.slane %v367, %v383
        %389 = vmatprep.subr.mxu0 %v304
        %390 = vmatpush1.msra.mxu0 %v303
        %391 = vmatprep.subr.mxu0 %v308
        %392 = vmatpush1.msra.mxu0 %v307
        %393 = vmatprep.subr.mxu0 %v312
        %394 = vmatpush1.msra.mxu0 %v311
        %395 = vmatprep.subr.mxu0 %v316
        %396 = vmatpush1.msra.mxu0 %v315
        %397 = vmatprep.subr.mxu0 %v320
        %398 = vmatpush1.msra.mxu0 %v319
        %399 = vmatprep.subr.mxu0 %v324
        %400 = vmatpush1.msra.mxu0 %v323
        %401 = vmatprep.subr.mxu0 %v328
        %402 = vmatpush1.msra.mxu0 %v327
        %403 = vmatprep.subr.mxu0 %v332
        %404 = vmatpush1.msra.mxu0 %v331
        %405 = vmatprep.subr.mxu0 %v336
        %406 = vmatpush1.msra.mxu0 %v335
        %407 = vmatprep.subr.mxu0 %v340
        %408 = vmatpush1.msra.mxu0 %v339
        %409 = vmatprep.subr.mxu0 %v344
        %410 = vmatpush1.msra.mxu0 %v343
        %411 = vmatprep.subr.mxu0 %v348
        %412 = vmatpush1.msra.mxu0 %v347
        %413 = vmatprep.subr.mxu0 %v352
        %414 = vmatpush1.msra.mxu0 %v351
        %415 = vmatprep.subr.mxu0 %v356
        %416 = vmatpush1.msra.mxu0 %v355
        %417 = vmatprep.subr.mxu0 %v360
        %418 = vmatpush1.msra.mxu0 %v359
        %419 = vmatprep.subr.mxu0 %v364
        %420 = vmatpush1.msra.mxu0 %v363
        %421 = vmatprep.subr.mxu0 0.0
        %422 = vmatpush1.msra.mxu0 0.0
        %423 = vmatprep.subr.mxu0 0.0
        %424 = vmatpush1.msra.mxu0 0.0
        %425 = vmatprep.subr.mxu0 0.0
        %426 = vmatpush1.msra.mxu0 0.0
        %427 = vmatprep.subr.mxu0 0.0
        %428 = vmatpush1.msra.mxu0 0.0
        %429 = vmatprep.subr.mxu0 0.0
        %430 = vmatpush1.msra.mxu0 0.0
        %431 = vmatprep.subr.mxu0 0.0
        %432 = vmatpush1.msra.mxu0 0.0
        %433 = vmatprep.subr.mxu0 0.0
        %434 = vmatpush1.msra.mxu0 0.0
        %435 = vmatprep.subr.mxu0 0.0
        %436 = vmatpush1.msra.mxu0 0.0
        %437 = vmatprep.subr.mxu0 0.0
        %438 = vmatpush1.msra.mxu0 0.0
        %439 = vmatprep.subr.mxu0 0.0
        %440 = vmatpush1.msra.mxu0 0.0
        %441 = vmatprep.subr.mxu0 0.0
        %442 = vmatpush1.msra.mxu0 0.0
        %443 = vmatprep.subr.mxu0 0.0
        %444 = vmatpush1.msra.mxu0 0.0
        %445 = vmatprep.subr.mxu0 0.0
        %446 = vmatpush1.msra.mxu0 0.0
        %447 = vmatprep.subr.mxu0 0.0
        %448 = vmatpush1.msra.mxu0 0.0
        %449 = vmatprep.subr.mxu0 0.0
        %450 = vmatpush1.msra.mxu0 0.0
        %451 = vmatprep.subr.mxu0 0.0
        %452 = vmatpush1.msra.mxu0 0.0
        %453 = vmatprep.mubr.f32.mxu0 0.0
        %454 = vmatmul.mubr.f32.gmra.mrb[0].mxu0 %v301
        %v455 = vpop.f32.mrb[0].mxu0
        %v456 = vadd.f32 %v372, %v455
        %v457 = vpop.f32.mrb[0].mxu0
        %v458 = vadd.f32 %v376, %v457
        %459 = vmatprep.mubr.f32.mxu0 0.0
        %460 = vmatmul.mubr.f32.gmra.mrb[0].mxu0 %v302
        %v461 = vpop.f32.mrb[0].mxu0
        %v462 = vadd.f32 %v372, %v461
        %v463 = vpop.f32.mrb[0].mxu0
        %v464 = vadd.f32 %v376, %v463
        %465 = vdwg.mxu0
        %466 = vmatprep.subr.mxu0 %v306
        %467 = vmatpush1.msra.mxu0 %v305
        %468 = vmatprep.subr.mxu0 %v310
        %469 = vmatpush1.msra.mxu0 %v309
        %470 = vmatprep.subr.mxu0 %v314
        %471 = vmatpush1.msra.mxu0 %v313
        %472 = vmatprep.subr.mxu0 %v318
        %473 = vmatpush1.msra.mxu0 %v317
        %474 = vmatprep.subr.mxu0 %v322
        %475 = vmatpush1.msra.mxu0 %v321
        %476 = vmatprep.subr.mxu0 %v326
        %477 = vmatpush1.msra.mxu0 %v325
        %478 = vmatprep.subr.mxu0 %v330
        %479 = vmatpush1.msra.mxu0 %v329
        %480 = vmatprep.subr.mxu0 %v334
        %481 = vmatpush1.msra.mxu0 %v333
        %482 = vmatprep.subr.mxu0 %v338
        %483 = vmatpush1.msra.mxu0 %v337
        %484 = vmatprep.subr.mxu0 %v342
        %485 = vmatpush1.msra.mxu0 %v341
        %486 = vmatprep.subr.mxu0 %v346
        %487 = vmatpush1.msra.mxu0 %v345
        %488 = vmatprep.subr.mxu0 %v350
        %489 = vmatpush1.msra.mxu0 %v349
        %490 = vmatprep.subr.mxu0 %v354
        %491 = vmatpush1.msra.mxu0 %v353
        %492 = vmatprep.subr.mxu0 %v358
        %493 = vmatpush1.msra.mxu0 %v357
        %494 = vmatprep.subr.mxu0 %v362
        %495 = vmatpush1.msra.mxu0 %v361
        %496 = vmatprep.subr.mxu0 %v366
        %497 = vmatpush1.msra.mxu0 %v365
        %498 = vmatprep.subr.mxu0 0.0
        %499 = vmatpush1.msra.mxu0 0.0
        %500 = vmatprep.subr.mxu0 0.0
        %501 = vmatpush1.msra.mxu0 0.0
        %502 = vmatprep.subr.mxu0 0.0
        %503 = vmatpush1.msra.mxu0 0.0
        %504 = vmatprep.subr.mxu0 0.0
        %505 = vmatpush1.msra.mxu0 0.0
        %506 = vmatprep.subr.mxu0 0.0
        %507 = vmatpush1.msra.mxu0 0.0
        %508 = vmatprep.subr.mxu0 0.0
        %509 = vmatpush1.msra.mxu0 0.0
        %510 = vmatprep.subr.mxu0 0.0
        %511 = vmatpush1.msra.mxu0 0.0
        %512 = vmatprep.subr.mxu0 0.0
        %513 = vmatpush1.msra.mxu0 0.0
        %514 = vmatprep.subr.mxu0 0.0
        %515 = vmatpush1.msra.mxu0 0.0
        %516 = vmatprep.subr.mxu0 0.0
        %517 = vmatpush1.msra.mxu0 0.0
        %518 = vmatprep.subr.mxu0 0.0
        %519 = vmatpush1.msra.mxu0 0.0
        %520 = vmatprep.subr.mxu0 0.0
        %521 = vmatpush1.msra.mxu0 0.0
        %522 = vmatprep.subr.mxu0 0.0
        %523 = vmatpush1.msra.mxu0 0.0
        %524 = vmatprep.subr.mxu0 0.0
        %525 = vmatpush1.msra.mxu0 0.0
        %526 = vmatprep.subr.mxu0 0.0
        %527 = vmatpush1.msra.mxu0 0.0
        %528 = vmatprep.subr.mxu0 0.0
        %529 = vmatpush1.msra.mxu0 0.0
        %530 = vmatprep.mubr.f32.mxu0 0.0
        %531 = vmatmul.mubr.f32.gmra.mrb[0].mxu0 %v301
        %v532 = vpop.f32.mrb[0].mxu0
        %v533 = vadd.f32 %v380, %v532
        %v534 = vpop.f32.mrb[0].mxu0
        %v535 = vadd.f32 %v384, %v534
        %536 = vmatprep.mubr.f32.mxu0 0.0
        %537 = vmatmul.mubr.f32.gmra.mrb[0].mxu0 %v302
        %v538 = vpop.f32.mrb[0].mxu0
        %v539 = vadd.f32 %v380, %v538
        %v540 = vpop.f32.mrb[0].mxu0
        %v541 = vadd.f32 %v384, %v540
        %542 = vdwg.mxu0
        %v543 = vld [vmem:[%s3] sm:$0xf]
        %vm544 = vcmp.ne.f32.partialorder %v543, 0.0
        %v545 = vmax.f32 %v456, 0.0
        %v546 = vmax.f32 %v458, 0.0
        %v547 = vmax.f32 %v533, 0.0
        %v548 = vmax.f32 %v535, 0.0
        %v549 = vmax.f32 %v462, 0.0
        %v550 = vmax.f32 %v464, 0.0
        %v551 = vmax.f32 %v539, 0.0
        %v552 = vmax.f32 %v541, 0.0
        %v553 = vsel %vm544, 1, 0
        %v554 = vlaneseq
        %v555 = vshrl.u32 %v554, 7
        %v556 = vsub.s32 0, %v555
        %v557 = vrot.slane %v553, %v556
        %v558 = vlaneseq
        %v559 = vshrl.u32 %v558, 7
        %v560 = vsub.s32 1, %v559
        %v561 = vrot.slane %v553, %v560
        %v562 = vlaneseq
        %v563 = vshrl.u32 %v562, 7
        %v564 = vsub.s32 2, %v563
        %v565 = vrot.slane %v553, %v564
        %v566 = vlaneseq
        %v567 = vshrl.u32 %v566, 7
        %v568 = vsub.s32 3, %v567
        %v569 = vrot.slane %v553, %v568
        %vm570 = vcmp.eq.s32.totalorder %v557, 1
        %vm571 = vcmp.eq.s32.totalorder %v561, 1
        %vm572 = vcmp.eq.s32.totalorder %v565, 1
        %vm573 = vcmp.eq.s32.totalorder %v569, 1
        %v574 = vsel %vm570, %v545, %v456
        %v575 = vsel %vm571, %v546, %v458
        %v576 = vsel %vm572, %v547, %v533
        %v577 = vsel %vm573, %v548, %v535
        %v578 = vsel %vm570, %v549, %v462
        %v579 = vsel %vm571, %v550, %v464
        %v580 = vsel %vm572, %v551, %v539
        %v581 = vsel %vm573, %v552, %v541
        %v582 = vld [vmem:[#allocation7] sm:$0xff]
        %v583 = vld [vmem:[#allocation7 + $0x8] sm:$0xff]
        %v584 = vld [vmem:[#allocation7 + $0x10] sm:$0xff]
        %v585 = vld [vmem:[#allocation7 + $0x18] sm:$0xff]
        %v586 = vld [vmem:[#allocation7 + $0x20] sm:$0xff]
        %v587 = vld [vmem:[#allocation7 + $0x28] sm:$0xff]
        %v588 = vld [vmem:[#allocation7 + $0x30] sm:$0xff]
        %v589 = vld [vmem:[#allocation7 + $0x38] sm:$0xff]
        %v590 = vld [vmem:[#allocation7 + $0x40] sm:$0xff]
        %v591 = vld [vmem:[#allocation7 + $0x48] sm:$0xff]
        %v592 = vld [vmem:[#allocation7 + $0x50] sm:$0xff]
        %v593 = vld [vmem:[#allocation7 + $0x58] sm:$0xff]
        %v594 = vld [vmem:[#allocation7 + $0x60] sm:$0xff]
        %v595 = vld [vmem:[#allocation7 + $0x68] sm:$0xff]
        %v596 = vld [vmem:[#allocation7 + $0x70] sm:$0xff]
        %v597 = vld [vmem:[#allocation7 + $0x78] sm:$0xff]
        %v598 = vld [vmem:[#allocation7 + $0x80] sm:$0xff]
        %v599 = vld [vmem:[#allocation7 + $0x88] sm:$0xff]
        %v600 = vld [vmem:[#allocation7 + $0x90] sm:$0xff]
        %v601 = vld [vmem:[#allocation7 + $0x98] sm:$0xff]
        %v602 = vld [vmem:[#allocation7 + $0xa0] sm:$0xff]
        %v603 = vld [vmem:[#allocation7 + $0xa8] sm:$0xff]
        %v604 = vld [vmem:[#allocation7 + $0xb0] sm:$0xff]
        %v605 = vld [vmem:[#allocation7 + $0xb8] sm:$0xff]
        %v606 = vld [vmem:[#allocation7 + $0xc0] sm:$0xff]
        %v607 = vld [vmem:[#allocation7 + $0xc8] sm:$0xff]
        %v608 = vld [vmem:[#allocation7 + $0xd0] sm:$0xff]
        %v609 = vld [vmem:[#allocation7 + $0xd8] sm:$0xff]
        %v610 = vld [vmem:[#allocation7 + $0xe0] sm:$0xff]
        %v611 = vld [vmem:[#allocation7 + $0xe8] sm:$0xff]
        %v612 = vld [vmem:[#allocation7 + $0xf0] sm:$0xff]
        %v613 = vld [vmem:[#allocation7 + $0xf8] sm:$0xff]
        %v614 = vld [vmem:[#allocation7 + $0x100] sm:$0xff]
        %v615 = vld [vmem:[#allocation7 + $0x108] sm:$0xff]
        %v616 = vld [vmem:[#allocation7 + $0x110] sm:$0xff]
        %v617 = vld [vmem:[#allocation7 + $0x118] sm:$0xff]
        %v618 = vld [vmem:[#allocation7 + $0x120] sm:$0xff]
        %v619 = vld [vmem:[#allocation7 + $0x128] sm:$0xff]
        %v620 = vld [vmem:[#allocation7 + $0x130] sm:$0xff]
        %v621 = vld [vmem:[#allocation7 + $0x138] sm:$0xff]
        %v622 = vld [vmem:[#allocation7 + $0x140] sm:$0xff]
        %v623 = vld [vmem:[#allocation7 + $0x148] sm:$0xff]
        %v624 = vld [vmem:[#allocation7 + $0x150] sm:$0xff]
        %v625 = vld [vmem:[#allocation7 + $0x158] sm:$0xff]
        %v626 = vld [vmem:[#allocation7 + $0x160] sm:$0xff]
        %v627 = vld [vmem:[#allocation7 + $0x168] sm:$0xff]
        %v628 = vld [vmem:[#allocation7 + $0x170] sm:$0xff]
        %v629 = vld [vmem:[#allocation7 + $0x178] sm:$0xff]
        %v630 = vld [vmem:[#allocation7 + $0x180] sm:$0xff]
        %v631 = vld [vmem:[#allocation7 + $0x188] sm:$0xff]
        %v632 = vld [vmem:[#allocation7 + $0x190] sm:$0xff]
        %v633 = vld [vmem:[#allocation7 + $0x198] sm:$0xff]
        %v634 = vld [vmem:[#allocation7 + $0x1a0] sm:$0xff]
        %v635 = vld [vmem:[#allocation7 + $0x1a8] sm:$0xff]
        %v636 = vld [vmem:[#allocation7 + $0x1b0] sm:$0xff]
        %v637 = vld [vmem:[#allocation7 + $0x1b8] sm:$0xff]
        %v638 = vld [vmem:[#allocation7 + $0x1c0] sm:$0xff]
        %v639 = vld [vmem:[#allocation7 + $0x1c8] sm:$0xff]
        %v640 = vld [vmem:[#allocation7 + $0x1d0] sm:$0xff]
        %v641 = vld [vmem:[#allocation7 + $0x1d8] sm:$0xff]
        %v642 = vld [vmem:[#allocation7 + $0x1e0] sm:$0xff]
        %v643 = vld [vmem:[#allocation7 + $0x1e8] sm:$0xff]
        %v644 = vld [vmem:[#allocation7 + $0x1f0] sm:$0xff]
        %v645 = vld [vmem:[#allocation7 + $0x1f8] sm:$0xff]
        %v646 = vld [vmem:[#allocation7 + $0x200] sm:$0xff]
        %v647 = vld [vmem:[#allocation7 + $0x208] sm:$0xff]
        %v648 = vld [vmem:[#allocation7 + $0x210] sm:$0xff]
        %v649 = vld [vmem:[#allocation7 + $0x218] sm:$0xff]
        %v650 = vld [vmem:[#allocation7 + $0x220] sm:$0xff]
        %v651 = vld [vmem:[#allocation7 + $0x228] sm:$0xff]
        %v652 = vld [vmem:[#allocation7 + $0x230] sm:$0xff]
        %v653 = vld [vmem:[#allocation7 + $0x238] sm:$0xff]
        %v654 = vld [vmem:[#allocation7 + $0x240] sm:$0xff]
        %v655 = vld [vmem:[#allocation7 + $0x248] sm:$0xff]
        %v656 = vld [vmem:[#allocation7 + $0x250] sm:$0xff]
        %v657 = vld [vmem:[#allocation7 + $0x258] sm:$0xff]
        %v658 = vld [vmem:[#allocation7 + $0x260] sm:$0xff]
        %v659 = vld [vmem:[#allocation7 + $0x268] sm:$0xff]
        %v660 = vld [vmem:[#allocation7 + $0x270] sm:$0xff]
        %v661 = vld [vmem:[#allocation7 + $0x278] sm:$0xff]
        %v662 = vld [vmem:[#allocation7 + $0x280] sm:$0xff]
        %v663 = vld [vmem:[#allocation7 + $0x288] sm:$0xff]
        %v664 = vld [vmem:[#allocation7 + $0x290] sm:$0xff]
        %v665 = vld [vmem:[#allocation7 + $0x298] sm:$0xff]
        %v666 = vld [vmem:[#allocation7 + $0x2a0] sm:$0xff]
        %v667 = vld [vmem:[#allocation7 + $0x2a8] sm:$0xff]
        %v668 = vld [vmem:[#allocation7 + $0x2b0] sm:$0xff]
        %v669 = vld [vmem:[#allocation7 + $0x2b8] sm:$0xff]
        %v670 = vld [vmem:[#allocation7 + $0x2c0] sm:$0xff]
        %v671 = vld [vmem:[#allocation7 + $0x2c8] sm:$0xff]
        %v672 = vld [vmem:[#allocation7 + $0x2d0] sm:$0xff]
        %v673 = vld [vmem:[#allocation7 + $0x2d8] sm:$0xff]
        %v674 = vld [vmem:[#allocation7 + $0x2e0] sm:$0xff]
        %v675 = vld [vmem:[#allocation7 + $0x2e8] sm:$0xff]
        %v676 = vld [vmem:[#allocation7 + $0x2f0] sm:$0xff]
        %v677 = vld [vmem:[#allocation7 + $0x2f8] sm:$0xff]
        %v678 = vld [vmem:[#allocation7 + $0x300] sm:$0xff]
        %v679 = vld [vmem:[#allocation7 + $0x308] sm:$0xff]
        %v680 = vld [vmem:[#allocation7 + $0x310] sm:$0xff]
        %v681 = vld [vmem:[#allocation7 + $0x318] sm:$0xff]
        %v682 = vld [vmem:[#allocation7 + $0x320] sm:$0xff]
        %v683 = vld [vmem:[#allocation7 + $0x328] sm:$0xff]
        %v684 = vld [vmem:[#allocation7 + $0x330] sm:$0xff]
        %v685 = vld [vmem:[#allocation7 + $0x338] sm:$0xff]
        %v686 = vld [vmem:[#allocation7 + $0x340] sm:$0xff]
        %v687 = vld [vmem:[#allocation7 + $0x348] sm:$0xff]
        %v688 = vld [vmem:[#allocation7 + $0x350] sm:$0xff]
        %v689 = vld [vmem:[#allocation7 + $0x358] sm:$0xff]
        %v690 = vld [vmem:[#allocation7 + $0x360] sm:$0xff]
        %v691 = vld [vmem:[#allocation7 + $0x368] sm:$0xff]
        %v692 = vld [vmem:[#allocation7 + $0x370] sm:$0xff]
        %v693 = vld [vmem:[#allocation7 + $0x378] sm:$0xff]
        %v694 = vld [vmem:[#allocation7 + $0x380] sm:$0xff]
        %v695 = vld [vmem:[#allocation7 + $0x388] sm:$0xff]
        %v696 = vld [vmem:[#allocation7 + $0x390] sm:$0xff]
        %v697 = vld [vmem:[#allocation7 + $0x398] sm:$0xff]
        %v698 = vld [vmem:[#allocation7 + $0x3a0] sm:$0xff]
        %v699 = vld [vmem:[#allocation7 + $0x3a8] sm:$0xff]
        %v700 = vld [vmem:[#allocation7 + $0x3b0] sm:$0xff]
        %v701 = vld [vmem:[#allocation7 + $0x3b8] sm:$0xff]
        %v702 = vld [vmem:[#allocation7 + $0x3c0] sm:$0xff]
        %v703 = vld [vmem:[#allocation7 + $0x3c8] sm:$0xff]
        %v704 = vld [vmem:[#allocation7 + $0x3d0] sm:$0xff]
        %v705 = vld [vmem:[#allocation7 + $0x3d8] sm:$0xff]
        %v706 = vld [vmem:[#allocation7 + $0x3e0] sm:$0xff]
        %v707 = vld [vmem:[#allocation7 + $0x3e8] sm:$0xff]
        %v708 = vld [vmem:[#allocation7 + $0x3f0] sm:$0xff]
        %v709 = vld [vmem:[#allocation7 + $0x3f8] sm:$0xff]
        %v710 = vld [vmem:[%s5] sm:$0x3]
        %v712 = vlaneseq
        %v713 = vshrl.u32 %v712, 7
        %v714 = vsub.s32 0, %v713
        %v715 = vrot.slane %v710, %v714
        %v716 = vlaneseq
        %v717 = vshrl.u32 %v716, 7
        %v718 = vsub.s32 1, %v717
        %v719 = vrot.slane %v710, %v718
        %722 = vmatprep.subr.mxu0 %v583
        %723 = vmatpush1.msra.mxu0 %v582
        %724 = vmatprep.subr.mxu0 %v585
        %725 = vmatpush1.msra.mxu0 %v584
        %726 = vmatprep.subr.mxu0 %v587
        %727 = vmatpush1.msra.mxu0 %v586
        %728 = vmatprep.subr.mxu0 %v589
        %729 = vmatpush1.msra.mxu0 %v588
        %730 = vmatprep.subr.mxu0 %v591
        %731 = vmatpush1.msra.mxu0 %v590
        %732 = vmatprep.subr.mxu0 %v593
        %733 = vmatpush1.msra.mxu0 %v592
        %734 = vmatprep.subr.mxu0 %v595
        %735 = vmatpush1.msra.mxu0 %v594
        %736 = vmatprep.subr.mxu0 %v597
        %737 = vmatpush1.msra.mxu0 %v596
        %738 = vmatprep.subr.mxu0 %v599
        %739 = vmatpush1.msra.mxu0 %v598
        %740 = vmatprep.subr.mxu0 %v601
        %741 = vmatpush1.msra.mxu0 %v600
        %742 = vmatprep.subr.mxu0 %v603
        %743 = vmatpush1.msra.mxu0 %v602
        %744 = vmatprep.subr.mxu0 %v605
        %745 = vmatpush1.msra.mxu0 %v604
        %746 = vmatprep.subr.mxu0 %v607
        %747 = vmatpush1.msra.mxu0 %v606
        %748 = vmatprep.subr.mxu0 %v609
        %749 = vmatpush1.msra.mxu0 %v608
        %750 = vmatprep.subr.mxu0 %v611
        %751 = vmatpush1.msra.mxu0 %v610
        %752 = vmatprep.subr.mxu0 %v613
        %753 = vmatpush1.msra.mxu0 %v612
        %754 = vmatprep.subr.mxu0 %v615
        %755 = vmatpush1.msra.mxu0 %v614
        %756 = vmatprep.subr.mxu0 %v617
        %757 = vmatpush1.msra.mxu0 %v616
        %758 = vmatprep.subr.mxu0 %v619
        %759 = vmatpush1.msra.mxu0 %v618
        %760 = vmatprep.subr.mxu0 %v621
        %761 = vmatpush1.msra.mxu0 %v620
        %762 = vmatprep.subr.mxu0 %v623
        %763 = vmatpush1.msra.mxu0 %v622
        %764 = vmatprep.subr.mxu0 %v625
        %765 = vmatpush1.msra.mxu0 %v624
        %766 = vmatprep.subr.mxu0 %v627
        %767 = vmatpush1.msra.mxu0 %v626
        %768 = vmatprep.subr.mxu0 %v629
        %769 = vmatpush1.msra.mxu0 %v628
        %770 = vmatprep.subr.mxu0 %v631
        %771 = vmatpush1.msra.mxu0 %v630
        %772 = vmatprep.subr.mxu0 %v633
        %773 = vmatpush1.msra.mxu0 %v632
        %774 = vmatprep.subr.mxu0 %v635
        %775 = vmatpush1.msra.mxu0 %v634
        %776 = vmatprep.subr.mxu0 %v637
        %777 = vmatpush1.msra.mxu0 %v636
        %778 = vmatprep.subr.mxu0 %v639
        %779 = vmatpush1.msra.mxu0 %v638
        %780 = vmatprep.subr.mxu0 %v641
        %781 = vmatpush1.msra.mxu0 %v640
        %782 = vmatprep.subr.mxu0 %v643
        %783 = vmatpush1.msra.mxu0 %v642
        %784 = vmatprep.subr.mxu0 %v645
        %785 = vmatpush1.msra.mxu0 %v644
        %786 = vmatprep.mubr.f32.mxu0 %v575
        %787 = vmatmul.mubr.f32.gmra.mrb[0].mxu0 %v574
        %v788 = vpop.f32.mrb[0].mxu0
        %v789 = vadd.f32 %v715, %v788
        %v790 = vpop.f32.mrb[0].mxu0
        %v791 = vadd.f32 %v719, %v790
        %792 = vmatprep.mubr.f32.mxu0 %v579
        %793 = vmatmul.mubr.f32.gmra.mrb[0].mxu0 %v578
        %v794 = vpop.f32.mrb[0].mxu0
        %v795 = vadd.f32 %v715, %v794
        %v796 = vpop.f32.mrb[0].mxu0
        %v797 = vadd.f32 %v719, %v796
        %798 = vdwg.mxu0
        %799 = vmatprep.subr.mxu0 %v647
        %800 = vmatpush1.msra.mxu0 %v646
        %801 = vmatprep.subr.mxu0 %v649
        %802 = vmatpush1.msra.mxu0 %v648
        %803 = vmatprep.subr.mxu0 %v651
        %804 = vmatpush1.msra.mxu0 %v650
        %805 = vmatprep.subr.mxu0 %v653
        %806 = vmatpush1.msra.mxu0 %v652
        %807 = vmatprep.subr.mxu0 %v655
        %808 = vmatpush1.msra.mxu0 %v654
        %809 = vmatprep.subr.mxu0 %v657
        %810 = vmatpush1.msra.mxu0 %v656
        %811 = vmatprep.subr.mxu0 %v659
        %812 = vmatpush1.msra.mxu0 %v658
        %813 = vmatprep.subr.mxu0 %v661
        %814 = vmatpush1.msra.mxu0 %v660
        %815 = vmatprep.subr.mxu0 %v663
        %816 = vmatpush1.msra.mxu0 %v662
        %817 = vmatprep.subr.mxu0 %v665
        %818 = vmatpush1.msra.mxu0 %v664
        %819 = vmatprep.subr.mxu0 %v667
        %820 = vmatpush1.msra.mxu0 %v666
        %821 = vmatprep.subr.mxu0 %v669
        %822 = vmatpush1.msra.mxu0 %v668
        %823 = vmatprep.subr.mxu0 %v671
        %824 = vmatpush1.msra.mxu0 %v670
        %825 = vmatprep.subr.mxu0 %v673
        %826 = vmatpush1.msra.mxu0 %v672
        %827 = vmatprep.subr.mxu0 %v675
        %828 = vmatpush1.msra.mxu0 %v674
        %829 = vmatprep.subr.mxu0 %v677
        %830 = vmatpush1.msra.mxu0 %v676
        %831 = vmatprep.subr.mxu0 %v679
        %832 = vmatpush1.msra.mxu0 %v678
        %833 = vmatprep.subr.mxu0 %v681
        %834 = vmatpush1.msra.mxu0 %v680
        %835 = vmatprep.subr.mxu0 %v683
        %836 = vmatpush1.msra.mxu0 %v682
        %837 = vmatprep.subr.mxu0 %v685
        %838 = vmatpush1.msra.mxu0 %v684
        %839 = vmatprep.subr.mxu0 %v687
        %840 = vmatpush1.msra.mxu0 %v686
        %841 = vmatprep.subr.mxu0 %v689
        %842 = vmatpush1.msra.mxu0 %v688
        %843 = vmatprep.subr.mxu0 %v691
        %844 = vmatpush1.msra.mxu0 %v690
        %845 = vmatprep.subr.mxu0 %v693
        %846 = vmatpush1.msra.mxu0 %v692
        %847 = vmatprep.subr.mxu0 %v695
        %848 = vmatpush1.msra.mxu0 %v694
        %849 = vmatprep.subr.mxu0 %v697
        %850 = vmatpush1.msra.mxu0 %v696
        %851 = vmatprep.subr.mxu0 %v699
        %852 = vmatpush1.msra.mxu0 %v698
        %853 = vmatprep.subr.mxu0 %v701
        %854 = vmatpush1.msra.mxu0 %v700
        %855 = vmatprep.subr.mxu0 %v703
        %856 = vmatpush1.msra.mxu0 %v702
        %857 = vmatprep.subr.mxu0 %v705
        %858 = vmatpush1.msra.mxu0 %v704
        %859 = vmatprep.subr.mxu0 %v707
        %860 = vmatpush1.msra.mxu0 %v706
        %861 = vmatprep.subr.mxu0 %v709
        %862 = vmatpush1.msra.mxu0 %v708
        %863 = vmatprep.mubr.f32.mxu0 %v577
        %864 = vmatmul.mubr.f32.gmra.mrb[0].mxu0 %v576
        %v865 = vpop.f32.mrb[0].mxu0
        %v866 = vadd.f32 %v789, %v865
        %v867 = vpop.f32.mrb[0].mxu0
        %v868 = vadd.f32 %v791, %v867
        %869 = vmatprep.mubr.f32.mxu0 %v581
        %870 = vmatmul.mubr.f32.gmra.mrb[0].mxu0 %v580
        %v871 = vpop.f32.mrb[0].mxu0
        %v872 = vadd.f32 %v795, %v871
        %v873 = vpop.f32.mrb[0].mxu0
        %v874 = vadd.f32 %v797, %v873
        %875 = vdwg.mxu0
        %876 = vst [vmem:[%s298] sm:$0xff] %v866
        %877 = vst [vmem:[%s298 + $0x8] sm:$0xff] %v868
        %878 = vst [vmem:[%s298 + $0x10] sm:$0xff] %v872
        %879 = vst [vmem:[%s298 + $0x18] sm:$0xff] %v874
        %s880 = sand.u32 %s163, 1
        %s881 = scalar_lea.sflag [#allocation4], %s880
        %s882 = sand.u32 %s163, 1
        %s883 = smul.addr %s882, 32
        %s884 = scalar_lea.vmem [#allocation8], %s883
        // Predicated region
        $region57: #{tpu_custom_call.1} parent=43 // pred_check
          %p885 = pneg %p173
        $region58: #{tpu_custom_call.1} parent=43 // pred_check_branch
          %887 = sbr.rel (%p885) target = $region60
        $region59: #{tpu_custom_call.1} parent=43 // pred_region
          %s888 = smul.u32 2, %s24
          %s890 = ssub.s32 512, 512
          %891 = vsyncadd %s881, %s890
          %s892 = smul.addr %s888, 2
          %s893 = smul.addr %s892, 128
          %s894 = scalar_lea.hbm %s6, %s893
          %s895 = sshll.u32 %s884, 4
          %s896 = int_to_ptr.vmem [resolvable:$true] %s895
          %901 = dma.vmem_to_hbm [thread:$0]  %s896, 512, %s894, %s881, 256, 256, 16
        $region60: #{tpu_custom_call.1} parent=43 // pred_fallthru
          _
      $region44: #{tpu_custom_call.1} parent=5 // pred_fallthru
        _
      %p902 = scmp.le.s32.totalorder 2, %s19
      // Predicated region
      $region61: #{tpu_custom_call.1} parent=5 // pred_check
        %p903 = pneg %p902
      $region62: #{tpu_custom_call.1} parent=5 // pred_check_branch
        %905 = sbr.rel (%p903) target = $region64
      $region63: #{tpu_custom_call.1} parent=5 // pred_region
        %s906 = ssub.s32 %s19, 2
        // Predicated region
        $region65: #{tpu_custom_call.1} parent=63 // pred_check
          %p907 = pneg %p179
        $region66: #{tpu_custom_call.1} parent=63 // pred_check_branch
          %909 = sbr.rel (%p907) target = $region68
        $region67: #{tpu_custom_call.1} parent=63 // pred_region
          %s910 = sand.u32 %s164, 1
          %s911 = scalar_lea.sflag [#allocation4], %s910
          %s912 = sand.u32 %s164, 1
          %s913 = smul.addr %s912, 32
          %s914 = scalar_lea.vmem [#allocation8], %s913
          %915 = dma.done %s911, 512
        $region68: #{tpu_custom_call.1} parent=63 // pred_fallthru
          _
      $region64: #{tpu_custom_call.1} parent=5 // pred_fallthru
        _
    $region6: #{tpu_custom_call.1} parent=1 // loop_footer
      %s23 = sadd.s32 1, %s19
    $region7: #{tpu_custom_call.1} parent=1 // loop_footer_branch
      %18 = sbr.rel target = $region3
    $region8: #{tpu_custom_call.1} parent=1 // loop_exit
      _
    %916 = vsyncpa [#allocation3], 1
    %s917 = scalar_lea.sflag [#allocation3], 1
    %918 = vsyncpa %s917, 1
    %919 = vsyncpa [#allocation6], 1
    %920 = vsyncpa [#allocation4], 1
    %s921 = scalar_lea.sflag [#allocation4], 1
    %922 = vsyncpa %s921, 1

</llo_original>
